<compile_context>
chip_gen: v7x
topology: tpu7x:2x2x1
jax: 0.10.0
libtpu: 0.0.40
codegen_flags: <defaults>
</compile_context>

<pallas_src>
import functools

import jax
import jax.numpy as jnp
from jax.experimental import pallas as pl
from jax.experimental.pallas import tpu as pltpu

LN_EPS = 1e-5  # PyTorch nn.LayerNorm default eps


def _layernorm(h, gamma, beta):
    """LayerNorm over the last axis, biased variance (matches PyTorch). f32 math."""
    inv_h = jnp.float32(1.0 / h.shape[-1])          # constant reciprocal: VPU mul, no divide
    mu = jnp.sum(h, axis=-1, keepdims=True) * inv_h
    d = h - mu
    var = jnp.sum(d * d, axis=-1, keepdims=True) * inv_h
    return d * jax.lax.rsqrt(var + LN_EPS) * gamma + beta


def _setnet_kernel(
    x_ref,                                     # (TILE_N, D) bf16 node-feature tile
    w1_ref, b1_ref, g1_ref, be1_ref,           # node layer 1: Linear + LayerNorm
    w2_ref, b2_ref, g2_ref, be2_ref,           # node layer 2: Linear + LayerNorm
    w3_ref, b3_ref, g3_ref, be3_ref,           # set layer 1:  Linear + LayerNorm
    w4_ref, b4_ref,                            # set layer 2:  final Linear
    out_ref,                                   # (1, H) f32
    acc_ref,                                   # (1, H) f32 pooled-sum accumulator (scratch)
    *, num_nodes, tile_n,
):
    step = pl.program_id(0)
    last = pl.num_programs(0) - 1

    @pl.when(step == 0)
    def _init():
        acc_ref[...] = jnp.zeros_like(acc_ref)

    x = x_ref[...]                                               # bf16 (TILE_N, D)

    # ---- node MLP, layer 1 (bf16 MXU operands, f32 accumulate) ----
    h = jnp.dot(x, w1_ref[...], preferred_element_type=jnp.float32) + b1_ref[...]
    h = _layernorm(h, g1_ref[...], be1_ref[...])
    h = jnp.maximum(h, 0.0)                                      # ReLU; Dropout = identity (eval)

    # ---- node MLP, layer 2 ----
    h = jnp.dot(h.astype(jnp.bfloat16), w2_ref[...],
                preferred_element_type=jnp.float32) + b2_ref[...]
    h = _layernorm(h, g2_ref[...], be2_ref[...])
    h = jnp.maximum(h, 0.0)

    # ---- mask rows of the (possibly ragged) last tile, accumulate pooled sum ----
    row = step * tile_n + jax.lax.broadcasted_iota(jnp.int32, (tile_n, 1), 0)
    h = jnp.where(row < num_nodes, h, 0.0)
    acc_ref[...] += jnp.sum(h, axis=0, keepdims=True)

    # ---- finalize: mean pool + set MLP, only on the last node tile ----
    @pl.when(step == last)
    def _finalize():
        pooled = acc_ref[...] * jnp.float32(1.0 / num_nodes)     # mean over nodes
        s = jnp.dot(pooled.astype(jnp.bfloat16), w3_ref[...],
                    preferred_element_type=jnp.float32) + b3_ref[...]
        s = _layernorm(s, g3_ref[...], be3_ref[...])
        s = jnp.maximum(s, 0.0)
        s = jnp.dot(s.astype(jnp.bfloat16), w4_ref[...],
                    preferred_element_type=jnp.float32) + b4_ref[...]
        out_ref[...] = s


def setnet_forward(x, params, *, tile_n=16):
    """x: (num_nodes, input_dim) f32. Returns (hidden_dim,) f32."""
    num_nodes, input_dim = x.shape
    hidden_dim = params["w1"].shape[1]
    assert tile_n % 8 == 0, "node tile must respect the (8, 128) sublane constraint"

    x_bf16 = x.astype(jnp.bfloat16)                              # halve HBM traffic of x
    grid = (pl.cdiv(num_nodes, tile_n),)

    def resident(shape):
        # Constant block index => parameter stays resident in VMEM, DMA'd once.
        nd = len(shape)
        return pl.BlockSpec(shape, lambda i, _nd=nd: (0,) * _nd)

    in_specs = [
        pl.BlockSpec((tile_n, input_dim), lambda i: (i, 0)),     # streamed node tiles
        resident(params["w1"].shape), resident(params["b1"].shape),
        resident(params["g1"].shape), resident(params["be1"].shape),
        resident(params["w2"].shape), resident(params["b2"].shape),
        resident(params["g2"].shape), resident(params["be2"].shape),
        resident(params["w3"].shape), resident(params["b3"].shape),
        resident(params["g3"].shape), resident(params["be3"].shape),
        resident(params["w4"].shape), resident(params["b4"].shape),
    ]

    kernel = functools.partial(_setnet_kernel, num_nodes=num_nodes, tile_n=tile_n)

    out = pl.pallas_call(
        kernel,
        out_shape=jax.ShapeDtypeStruct((1, hidden_dim), jnp.float32),
        grid_spec=pltpu.PrefetchScalarGridSpec(
            num_scalar_prefetch=0,
            grid=grid,
            in_specs=in_specs,
            out_specs=pl.BlockSpec((1, hidden_dim), lambda i: (0, 0)),
            scratch_shapes=[pltpu.VMEM((1, hidden_dim), jnp.float32)],
        ),
        compiler_params=pltpu.CompilerParams(
            dimension_semantics=("arbitrary",),                  # node axis is a reduction
        ),
    )(
        x_bf16,
        params["w1"], params["b1"], params["g1"], params["be1"],
        params["w2"], params["b2"], params["g2"], params["be2"],
        params["w3"], params["b3"], params["g3"], params["be3"],
        params["w4"], params["b4"],
    )
    return out[0]  # (hidden_dim,)

# TODO(synk): for batched SetNet (many sets), add a leading "parallel" set axis so the
# two v7x TensorCores each take half the sets; the single-set module API has no batch dim.


def init_params(key, input_dim, hidden_dim):
    """PyTorch-style uniform init. Linear weights stored (in, out) so kernel does x @ W + b.
    Weights are bf16 (MXU operands); biases / LayerNorm params stay f32 (VPU path)."""
    ks = jax.random.split(key, 4)
    scale_in = 1.0 / jnp.sqrt(jnp.float32(input_dim))
    scale_h = 1.0 / jnp.sqrt(jnp.float32(hidden_dim))

    def lin(k, d_in, d_out, scale):
        kw, kb = jax.random.split(k)
        w = jax.random.uniform(kw, (d_in, d_out), jnp.float32, -scale, scale)
        b = jax.random.uniform(kb, (1, d_out), jnp.float32, -scale, scale)
        return w.astype(jnp.bfloat16), b

    w1, b1 = lin(ks[0], input_dim, hidden_dim, scale_in)
    w2, b2 = lin(ks[1], hidden_dim, hidden_dim, scale_h)
    w3, b3 = lin(ks[2], hidden_dim, hidden_dim, scale_h)
    w4, b4 = lin(ks[3], hidden_dim, hidden_dim, scale_h)

    ones = jnp.ones((1, hidden_dim), jnp.float32)
    zeros = jnp.zeros((1, hidden_dim), jnp.float32)

    return dict(
        w1=w1, b1=b1, g1=ones, be1=zeros,
        w2=w2, b2=b2, g2=ones, be2=zeros,
        w3=w3, b3=b3, g3=ones, be3=zeros,
        w4=w4, b4=b4,
    )


def setnet_reference(x, p):
    """Pure-JAX reference of the same forward pass (same bf16-operand / f32-accumulate
    matmul precision as the kernel) for validation."""
    def ln(h, g, b):
        mu = h.mean(-1, keepdims=True)
        var = ((h - mu) ** 2).mean(-1, keepdims=True)
        return (h - mu) / jnp.sqrt(var + LN_EPS) * g + b

    xb = x.astype(jnp.bfloat16)
    h = jnp.dot(xb, p["w1"], preferred_element_type=jnp.float32) + p["b1"]
    h = jnp.maximum(ln(h, p["g1"], p["be1"]), 0.0)
    h = jnp.dot(h.astype(jnp.bfloat16), p["w2"], preferred_element_type=jnp.float32) + p["b2"]
    h = jnp.maximum(ln(h, p["g2"], p["be2"]), 0.0)
    s = h.mean(0, keepdims=True)
    s = jnp.dot(s.astype(jnp.bfloat16), p["w3"], preferred_element_type=jnp.float32) + p["b3"]
    s = jnp.maximum(ln(s, p["g3"], p["be3"]), 0.0)
    s = jnp.dot(s.astype(jnp.bfloat16), p["w4"], preferred_element_type=jnp.float32) + p["b4"]
    return s[0]


if __name__ == "__main__":
    # Small but TPU-friendly shapes: hidden_dim lane-dense (128), node axis ragged (50)
    # to exercise the masked last tile.
    num_nodes, input_dim, hidden_dim = 50, 16, 128

    key = jax.random.PRNGKey(0)
    k_x, k_p = jax.random.split(key)
    x = jax.random.normal(k_x, (num_nodes, input_dim), jnp.float32)
    params = init_params(k_p, input_dim, hidden_dim)

    out = setnet_forward(x, params, tile_n=16)
    out = jax.block_until_ready(out)

    ref = setnet_reference(x, params)
    assert out.shape == (hidden_dim,)
    assert jnp.allclose(out, ref, atol=5e-3, rtol=5e-3), (out, ref)

    print("KERNEL_OK")
</pallas_src>

<mosaic_0001>
module attributes {stable_mosaic.version = 11 : i64} {
  func.func @_setnet_kernel(%arg0: i32, %arg1: memref<16x16xbf16, #tpu.memory_space<vmem>>, %arg2: memref<16x128xbf16, #tpu.memory_space<vmem>>, %arg3: memref<1x128xf32, #tpu.memory_space<vmem>>, %arg4: memref<1x128xf32, #tpu.memory_space<vmem>>, %arg5: memref<1x128xf32, #tpu.memory_space<vmem>>, %arg6: memref<128x128xbf16, #tpu.memory_space<vmem>>, %arg7: memref<1x128xf32, #tpu.memory_space<vmem>>, %arg8: memref<1x128xf32, #tpu.memory_space<vmem>>, %arg9: memref<1x128xf32, #tpu.memory_space<vmem>>, %arg10: memref<128x128xbf16, #tpu.memory_space<vmem>>, %arg11: memref<1x128xf32, #tpu.memory_space<vmem>>, %arg12: memref<1x128xf32, #tpu.memory_space<vmem>>, %arg13: memref<1x128xf32, #tpu.memory_space<vmem>>, %arg14: memref<128x128xbf16, #tpu.memory_space<vmem>>, %arg15: memref<1x128xf32, #tpu.memory_space<vmem>>, %arg16: memref<1x128xf32, #tpu.memory_space<vmem>>, %arg17: memref<1x128xf32, #tpu.memory_space<vmem>>) attributes {dimension_semantics = [#tpu.dimension_semantics<arbitrary>], iteration_bounds = array<i64: 4>, scalar_prefetch = 0 : i64, scratch_operands = 1 : i64, tpu.core_type = #tpu.core_type<tc>, window_params = [{transform_indices = @transform_0, window_bounds = array<i64: 16, 16>}, {pipeline_mode = #tpu.pipeline_mode<synchronous>, transform_indices = @transform_1, window_bounds = array<i64: 16, 128>}, {pipeline_mode = #tpu.pipeline_mode<synchronous>, transform_indices = @transform_2, window_bounds = array<i64: 1, 128>}, {pipeline_mode = #tpu.pipeline_mode<synchronous>, transform_indices = @transform_3, window_bounds = array<i64: 1, 128>}, {pipeline_mode = #tpu.pipeline_mode<synchronous>, transform_indices = @transform_4, window_bounds = array<i64: 1, 128>}, {pipeline_mode = #tpu.pipeline_mode<synchronous>, transform_indices = @transform_5, window_bounds = array<i64: 128, 128>}, {pipeline_mode = #tpu.pipeline_mode<synchronous>, transform_indices = @transform_6, window_bounds = array<i64: 1, 128>}, {pipeline_mode = #tpu.pipeline_mode<synchronous>, transform_indices = @transform_7, window_bounds = array<i64: 1, 128>}, {pipeline_mode = #tpu.pipeline_mode<synchronous>, transform_indices = @transform_8, window_bounds = array<i64: 1, 128>}, {pipeline_mode = #tpu.pipeline_mode<synchronous>, transform_indices = @transform_9, window_bounds = array<i64: 128, 128>}, {pipeline_mode = #tpu.pipeline_mode<synchronous>, transform_indices = @transform_10, window_bounds = array<i64: 1, 128>}, {pipeline_mode = #tpu.pipeline_mode<synchronous>, transform_indices = @transform_11, window_bounds = array<i64: 1, 128>}, {pipeline_mode = #tpu.pipeline_mode<synchronous>, transform_indices = @transform_12, window_bounds = array<i64: 1, 128>}, {pipeline_mode = #tpu.pipeline_mode<synchronous>, transform_indices = @transform_13, window_bounds = array<i64: 128, 128>}, {pipeline_mode = #tpu.pipeline_mode<synchronous>, transform_indices = @transform_14, window_bounds = array<i64: 1, 128>}, {pipeline_mode = #tpu.pipeline_mode<synchronous>, transform_indices = @transform_15, window_bounds = array<i64: 1, 128>}]} {
    %c0_i32 = arith.constant 0 : i32
    %0 = arith.cmpi eq, %arg0, %c0_i32 : i32
    %1 = arith.extui %0 : i1 to i32
    %c0_i32_0 = arith.constant 0 : i32
    %2 = arith.cmpi ne, %1, %c0_i32_0 : i32
    scf.if %2 {
      %cst_38 = arith.constant 0.000000e+00 : f32
      %81 = vector.broadcast %cst_38 : f32 to vector<1x128xf32>
      %c0_39 = arith.constant 0 : index
      %c0_40 = arith.constant 0 : index
      %82 = vector.load %arg17[%c0_39, %c0_40] : memref<1x128xf32, #tpu.memory_space<vmem>>, vector<1x128xf32>
      tpu.vector_store %arg17[%c0_39, %c0_40], %81 {strides = array<i32>} : memref<1x128xf32, #tpu.memory_space<vmem>>, vector<1x128xf32>,
    } else {
    }
    %c0 = arith.constant 0 : index
    %c0_1 = arith.constant 0 : index
    %3 = vector.load %arg1[%c0, %c0_1] : memref<16x16xbf16, #tpu.memory_space<vmem>>, vector<16x16xbf16>
    %c0_2 = arith.constant 0 : index
    %c0_3 = arith.constant 0 : index
    %4 = vector.load %arg2[%c0_2, %c0_3] : memref<16x128xbf16, #tpu.memory_space<vmem>>, vector<16x128xbf16>
    %cst = arith.constant dense<0.000000e+00> : vector<16x128xf32>
    %5 = tpu.matmul %3, %4, %cst {dimension_numbers = #tpu.dot_dimension_numbers<[1], [0], [0], [1], [0, 0, 1, 1], [], []>} : vector<16x16xbf16>, vector<16x128xbf16>, vector<16x128xf32> -> vector<16x128xf32>
    %c0_4 = arith.constant 0 : index
    %c0_5 = arith.constant 0 : index
    %6 = vector.load %arg3[%c0_4, %c0_5] : memref<1x128xf32, #tpu.memory_space<vmem>>, vector<1x128xf32>
    %7 = vector.broadcast %6 : vector<1x128xf32> to vector<16x128xf32>
    %8 = arith.addf %5, %7 : vector<16x128xf32>
    %c0_6 = arith.constant 0 : index
    %c0_7 = arith.constant 0 : index
    %9 = vector.load %arg4[%c0_6, %c0_7] : memref<1x128xf32, #tpu.memory_space<vmem>>, vector<1x128xf32>
    %c0_8 = arith.constant 0 : index
    %c0_9 = arith.constant 0 : index
    %10 = vector.load %arg5[%c0_8, %c0_9] : memref<1x128xf32, #tpu.memory_space<vmem>>, vector<1x128xf32>
    %cst_10 = arith.constant dense<0.000000e+00> : vector<16xf32>
    %11 = vector.multi_reduction <add>, %8, %cst_10 [1] : vector<16x128xf32> to vector<16xf32>
    %12 = vector.shape_cast %11 : vector<16xf32> to vector<16x1xf32>
    %cst_11 = arith.constant 7.812500e-03 : f32
    %13 = vector.broadcast %cst_11 : f32 to vector<16x1xf32>
    %14 = arith.mulf %12, %13 : vector<16x1xf32>
    %15 = vector.broadcast %14 : vector<16x1xf32> to vector<16x128xf32>
    %16 = arith.subf %8, %15 : vector<16x128xf32>
    %17 = arith.mulf %16, %16 : vector<16x128xf32>
    %cst_12 = arith.constant dense<0.000000e+00> : vector<16xf32>
    %18 = vector.multi_reduction <add>, %17, %cst_12 [1] : vector<16x128xf32> to vector<16xf32>
    %19 = vector.shape_cast %18 : vector<16xf32> to vector<16x1xf32>
    %cst_13 = arith.constant 7.812500e-03 : f32
    %20 = vector.broadcast %cst_13 : f32 to vector<16x1xf32>
    %21 = arith.mulf %19, %20 : vector<16x1xf32>
    %cst_14 = arith.constant 9.99999974E-6 : f32
    %22 = vector.broadcast %cst_14 : f32 to vector<16x1xf32>
    %23 = arith.addf %21, %22 : vector<16x1xf32>
    %24 = math.rsqrt %23 : vector<16x1xf32>
    %25 = vector.broadcast %24 : vector<16x1xf32> to vector<16x128xf32>
    %26 = arith.mulf %16, %25 : vector<16x128xf32>
    %27 = vector.broadcast %9 : vector<1x128xf32> to vector<16x128xf32>
    %28 = arith.mulf %26, %27 : vector<16x128xf32>
    %29 = vector.broadcast %10 : vector<1x128xf32> to vector<16x128xf32>
    %30 = arith.addf %28, %29 : vector<16x128xf32>
    %cst_15 = arith.constant 0.000000e+00 : f32
    %31 = vector.broadcast %cst_15 : f32 to vector<16x128xf32>
    %32 = arith.maximumf %30, %31 : vector<16x128xf32>
    %33 = arith.truncf %32 : vector<16x128xf32> to vector<16x128xbf16>
    %c0_16 = arith.constant 0 : index
    %c0_17 = arith.constant 0 : index
    %34 = vector.load %arg6[%c0_16, %c0_17] : memref<128x128xbf16, #tpu.memory_space<vmem>>, vector<128x128xbf16>
    %cst_18 = arith.constant dense<0.000000e+00> : vector<16x128xf32>
    %35 = tpu.matmul %33, %34, %cst_18 {dimension_numbers = #tpu.dot_dimension_numbers<[1], [0], [0], [1], [0, 0, 1, 1], [], []>} : vector<16x128xbf16>, vector<128x128xbf16>, vector<16x128xf32> -> vector<16x128xf32>
    %c0_19 = arith.constant 0 : index
    %c0_20 = arith.constant 0 : index
    %36 = vector.load %arg7[%c0_19, %c0_20] : memref<1x128xf32, #tpu.memory_space<vmem>>, vector<1x128xf32>
    %37 = vector.broadcast %36 : vector<1x128xf32> to vector<16x128xf32>
    %38 = arith.addf %35, %37 : vector<16x128xf32>
    %c0_21 = arith.constant 0 : index
    %c0_22 = arith.constant 0 : index
    %39 = vector.load %arg8[%c0_21, %c0_22] : memref<1x128xf32, #tpu.memory_space<vmem>>, vector<1x128xf32>
    %c0_23 = arith.constant 0 : index
    %c0_24 = arith.constant 0 : index
    %40 = vector.load %arg9[%c0_23, %c0_24] : memref<1x128xf32, #tpu.memory_space<vmem>>, vector<1x128xf32>
    %cst_25 = arith.constant dense<0.000000e+00> : vector<16xf32>
    %41 = vector.multi_reduction <add>, %38, %cst_25 [1] : vector<16x128xf32> to vector<16xf32>
    %42 = vector.shape_cast %41 : vector<16xf32> to vector<16x1xf32>
    %cst_26 = arith.constant 7.812500e-03 : f32
    %43 = vector.broadcast %cst_26 : f32 to vector<16x1xf32>
    %44 = arith.mulf %42, %43 : vector<16x1xf32>
    %45 = vector.broadcast %44 : vector<16x1xf32> to vector<16x128xf32>
    %46 = arith.subf %38, %45 : vector<16x128xf32>
    %47 = arith.mulf %46, %46 : vector<16x128xf32>
    %cst_27 = arith.constant dense<0.000000e+00> : vector<16xf32>
    %48 = vector.multi_reduction <add>, %47, %cst_27 [1] : vector<16x128xf32> to vector<16xf32>
    %49 = vector.shape_cast %48 : vector<16xf32> to vector<16x1xf32>
    %cst_28 = arith.constant 7.812500e-03 : f32
    %50 = vector.broadcast %cst_28 : f32 to vector<16x1xf32>
    %51 = arith.mulf %49, %50 : vector<16x1xf32>
    %cst_29 = arith.constant 9.99999974E-6 : f32
    %52 = vector.broadcast %cst_29 : f32 to vector<16x1xf32>
    %53 = arith.addf %51, %52 : vector<16x1xf32>
    %54 = math.rsqrt %53 : vector<16x1xf32>
    %55 = vector.broadcast %54 : vector<16x1xf32> to vector<16x128xf32>
    %56 = arith.mulf %46, %55 : vector<16x128xf32>
    %57 = vector.broadcast %39 : vector<1x128xf32> to vector<16x128xf32>
    %58 = arith.mulf %56, %57 : vector<16x128xf32>
    %59 = vector.broadcast %40 : vector<1x128xf32> to vector<16x128xf32>
    %60 = arith.addf %58, %59 : vector<16x128xf32>
    %cst_30 = arith.constant 0.000000e+00 : f32
    %61 = vector.broadcast %cst_30 : f32 to vector<16x128xf32>
    %62 = arith.maximumf %60, %61 : vector<16x128xf32>
    %c16_i32 = arith.constant 16 : i32
    %63 = arith.muli %arg0, %c16_i32 : i32
    %64 = tpu.iota {dimensions = array<i32: 0>} : vector<16x1xi32>
    %65 = vector.broadcast %63 : i32 to vector<16x1xi32>
    %66 = arith.addi %65, %64 : vector<16x1xi32>
    %c50_i32 = arith.constant 50 : i32
    %67 = vector.broadcast %c50_i32 : i32 to vector<16x1xi32>
    %68 = arith.cmpi slt, %66, %67 : vector<16x1xi32>
    %cst_31 = arith.constant 0.000000e+00 : f32
    %69 = vector.shape_cast %68 : vector<16x1xi1> to vector<16x1xi1>
    %70 = vector.broadcast %69 : vector<16x1xi1> to vector<16x128xi1>
    %71 = vector.broadcast %cst_31 : f32 to vector<16x128xf32>
    %72 = arith.select %70, %62, %71 : vector<16x128xi1>, vector<16x128xf32>
    %c0_32 = arith.constant 0 : index
    %c0_33 = arith.constant 0 : index
    %73 = vector.load %arg17[%c0_32, %c0_33] : memref<1x128xf32, #tpu.memory_space<vmem>>, vector<1x128xf32>
    %cst_34 = arith.constant dense<0.000000e+00> : vector<128xf32>
    %74 = vector.multi_reduction <add>, %72, %cst_34 [0] : vector<16x128xf32> to vector<128xf32>
    %75 = vector.shape_cast %74 : vector<128xf32> to vector<1x128xf32>
    %76 = arith.addf %73, %75 : vector<1x128xf32>
    %c0_35 = arith.constant 0 : index
    %c0_36 = arith.constant 0 : index
    %77 = vector.load %arg17[%c0_35, %c0_36] : memref<1x128xf32, #tpu.memory_space<vmem>>, vector<1x128xf32>
    tpu.vector_store %arg17[%c0_35, %c0_36], %76 {strides = array<i32>} : memref<1x128xf32, #tpu.memory_space<vmem>>, vector<1x128xf32>,
    %c3_i32 = arith.constant 3 : i32
    %78 = arith.cmpi eq, %arg0, %c3_i32 : i32
    %79 = arith.extui %78 : i1 to i32
    %c0_i32_37 = arith.constant 0 : i32
    %80 = arith.cmpi ne, %79, %c0_i32_37 : i32
    scf.if %80 {
      %c0_38 = arith.constant 0 : index
      %c0_39 = arith.constant 0 : index
      %81 = vector.load %arg17[%c0_38, %c0_39] : memref<1x128xf32, #tpu.memory_space<vmem>>, vector<1x128xf32>
      %cst_40 = arith.constant 2.000000e-02 : f32
      %82 = vector.broadcast %cst_40 : f32 to vector<1x128xf32>
      %83 = arith.mulf %81, %82 : vector<1x128xf32>
      %84 = arith.truncf %83 : vector<1x128xf32> to vector<1x128xbf16>
      %c0_41 = arith.constant 0 : index
      %c0_42 = arith.constant 0 : index
      %85 = vector.load %arg10[%c0_41, %c0_42] : memref<128x128xbf16, #tpu.memory_space<vmem>>, vector<128x128xbf16>
      %cst_43 = arith.constant dense<0.000000e+00> : vector<1x128xf32>
      %86 = tpu.matmul %84, %85, %cst_43 {dimension_numbers = #tpu.dot_dimension_numbers<[1], [0], [0], [1], [0, 0, 1, 1], [], []>} : vector<1x128xbf16>, vector<128x128xbf16>, vector<1x128xf32> -> vector<1x128xf32>
      %c0_44 = arith.constant 0 : index
      %c0_45 = arith.constant 0 : index
      %87 = vector.load %arg11[%c0_44, %c0_45] : memref<1x128xf32, #tpu.memory_space<vmem>>, vector<1x128xf32>
      %88 = arith.addf %86, %87 : vector<1x128xf32>
      %c0_46 = arith.constant 0 : index
      %c0_47 = arith.constant 0 : index
      %89 = vector.load %arg12[%c0_46, %c0_47] : memref<1x128xf32, #tpu.memory_space<vmem>>, vector<1x128xf32>
      %c0_48 = arith.constant 0 : index
      %c0_49 = arith.constant 0 : index
      %90 = vector.load %arg13[%c0_48, %c0_49] : memref<1x128xf32, #tpu.memory_space<vmem>>, vector<1x128xf32>
      %cst_50 = arith.constant dense<0.000000e+00> : vector<1xf32>
      %91 = vector.multi_reduction <add>, %88, %cst_50 [1] : vector<1x128xf32> to vector<1xf32>
      %92 = vector.shape_cast %91 : vector<1xf32> to vector<1x1xf32>
      %cst_51 = arith.constant 7.812500e-03 : f32
      %93 = vector.broadcast %cst_51 : f32 to vector<1x1xf32>
      %94 = arith.mulf %92, %93 : vector<1x1xf32>
      %95 = vector.broadcast %94 : vector<1x1xf32> to vector<1x128xf32>
      %96 = arith.subf %88, %95 : vector<1x128xf32>
      %97 = arith.mulf %96, %96 : vector<1x128xf32>
      %cst_52 = arith.constant dense<0.000000e+00> : vector<1xf32>
      %98 = vector.multi_reduction <add>, %97, %cst_52 [1] : vector<1x128xf32> to vector<1xf32>
      %99 = vector.shape_cast %98 : vector<1xf32> to vector<1x1xf32>
      %cst_53 = arith.constant 7.812500e-03 : f32
      %100 = vector.broadcast %cst_53 : f32 to vector<1x1xf32>
      %101 = arith.mulf %99, %100 : vector<1x1xf32>
      %cst_54 = arith.constant 9.99999974E-6 : f32
      %102 = vector.broadcast %cst_54 : f32 to vector<1x1xf32>
      %103 = arith.addf %101, %102 : vector<1x1xf32>
      %104 = math.rsqrt %103 : vector<1x1xf32>
      %105 = vector.broadcast %104 : vector<1x1xf32> to vector<1x128xf32>
      %106 = arith.mulf %96, %105 : vector<1x128xf32>
      %107 = arith.mulf %106, %89 : vector<1x128xf32>
      %108 = arith.addf %107, %90 : vector<1x128xf32>
      %cst_55 = arith.constant 0.000000e+00 : f32
      %109 = vector.broadcast %cst_55 : f32 to vector<1x128xf32>
      %110 = arith.maximumf %108, %109 : vector<1x128xf32>
      %111 = arith.truncf %110 : vector<1x128xf32> to vector<1x128xbf16>
      %c0_56 = arith.constant 0 : index
      %c0_57 = arith.constant 0 : index
      %112 = vector.load %arg14[%c0_56, %c0_57] : memref<128x128xbf16, #tpu.memory_space<vmem>>, vector<128x128xbf16>
      %cst_58 = arith.constant dense<0.000000e+00> : vector<1x128xf32>
      %113 = tpu.matmul %111, %112, %cst_58 {dimension_numbers = #tpu.dot_dimension_numbers<[1], [0], [0], [1], [0, 0, 1, 1], [], []>} : vector<1x128xbf16>, vector<128x128xbf16>, vector<1x128xf32> -> vector<1x128xf32>
      %c0_59 = arith.constant 0 : index
      %c0_60 = arith.constant 0 : index
      %114 = vector.load %arg15[%c0_59, %c0_60] : memref<1x128xf32, #tpu.memory_space<vmem>>, vector<1x128xf32>
      %115 = arith.addf %113, %114 : vector<1x128xf32>
      %c0_61 = arith.constant 0 : index
      %c0_62 = arith.constant 0 : index
      %116 = vector.load %arg16[%c0_61, %c0_62] : memref<1x128xf32, #tpu.memory_space<vmem>>, vector<1x128xf32>
      tpu.vector_store %arg16[%c0_61, %c0_62], %115 {strides = array<i32>} : memref<1x128xf32, #tpu.memory_space<vmem>>, vector<1x128xf32>,
    } else {
    }
    return
  }
  func.func @transform_0(%arg0: i32) -> (i32, i32) {
    %c0_i32 = arith.constant 0 : i32
    %c0_i32_0 = arith.constant 0 : i32
    return %arg0, %c0_i32 : i32, i32
  }
  func.func @transform_1(%arg0: i32) -> (i32, i32) {
    %c0_i32 = arith.constant 0 : i32
    %c0_i32_0 = arith.constant 0 : i32
    %c0_i32_1 = arith.constant 0 : i32
    return %c0_i32, %c0_i32_0 : i32, i32
  }
  func.func @transform_2(%arg0: i32) -> (i32, i32) {
    %c0_i32 = arith.constant 0 : i32
    %c0_i32_0 = arith.constant 0 : i32
    %c0_i32_1 = arith.constant 0 : i32
    return %c0_i32, %c0_i32_0 : i32, i32
  }
  func.func @transform_3(%arg0: i32) -> (i32, i32) {
    %c0_i32 = arith.constant 0 : i32
    %c0_i32_0 = arith.constant 0 : i32
    %c0_i32_1 = arith.constant 0 : i32
    return %c0_i32, %c0_i32_0 : i32, i32
  }
  func.func @transform_4(%arg0: i32) -> (i32, i32) {
    %c0_i32 = arith.constant 0 : i32
    %c0_i32_0 = arith.constant 0 : i32
    %c0_i32_1 = arith.constant 0 : i32
    return %c0_i32, %c0_i32_0 : i32, i32
  }
  func.func @transform_5(%arg0: i32) -> (i32, i32) {
    %c0_i32 = arith.constant 0 : i32
    %c0_i32_0 = arith.constant 0 : i32
    %c0_i32_1 = arith.constant 0 : i32
    return %c0_i32, %c0_i32_0 : i32, i32
  }
  func.func @transform_6(%arg0: i32) -> (i32, i32) {
    %c0_i32 = arith.constant 0 : i32
    %c0_i32_0 = arith.constant 0 : i32
    %c0_i32_1 = arith.constant 0 : i32
    return %c0_i32, %c0_i32_0 : i32, i32
  }
  func.func @transform_7(%arg0: i32) -> (i32, i32) {
    %c0_i32 = arith.constant 0 : i32
    %c0_i32_0 = arith.constant 0 : i32
    %c0_i32_1 = arith.constant 0 : i32
    return %c0_i32, %c0_i32_0 : i32, i32
  }
  func.func @transform_8(%arg0: i32) -> (i32, i32) {
    %c0_i32 = arith.constant 0 : i32
    %c0_i32_0 = arith.constant 0 : i32
    %c0_i32_1 = arith.constant 0 : i32
    return %c0_i32, %c0_i32_0 : i32, i32
  }
  func.func @transform_9(%arg0: i32) -> (i32, i32) {
    %c0_i32 = arith.constant 0 : i32
    %c0_i32_0 = arith.constant 0 : i32
    %c0_i32_1 = arith.constant 0 : i32
    return %c0_i32, %c0_i32_0 : i32, i32
  }
  func.func @transform_10(%arg0: i32) -> (i32, i32) {
    %c0_i32 = arith.constant 0 : i32
    %c0_i32_0 = arith.constant 0 : i32
    %c0_i32_1 = arith.constant 0 : i32
    return %c0_i32, %c0_i32_0 : i32, i32
  }
  func.func @transform_11(%arg0: i32) -> (i32, i32) {
    %c0_i32 = arith.constant 0 : i32
    %c0_i32_0 = arith.constant 0 : i32
    %c0_i32_1 = arith.constant 0 : i32
    return %c0_i32, %c0_i32_0 : i32, i32
  }
  func.func @transform_12(%arg0: i32) -> (i32, i32) {
    %c0_i32 = arith.constant 0 : i32
    %c0_i32_0 = arith.constant 0 : i32
    %c0_i32_1 = arith.constant 0 : i32
    return %c0_i32, %c0_i32_0 : i32, i32
  }
  func.func @transform_13(%arg0: i32) -> (i32, i32) {
    %c0_i32 = arith.constant 0 : i32
    %c0_i32_0 = arith.constant 0 : i32
    %c0_i32_1 = arith.constant 0 : i32
    return %c0_i32, %c0_i32_0 : i32, i32
  }
  func.func @transform_14(%arg0: i32) -> (i32, i32) {
    %c0_i32 = arith.constant 0 : i32
    %c0_i32_0 = arith.constant 0 : i32
    %c0_i32_1 = arith.constant 0 : i32
    return %c0_i32, %c0_i32_0 : i32, i32
  }
  func.func @transform_15(%arg0: i32) -> (i32, i32) {
    %c0_i32 = arith.constant 0 : i32
    %c0_i32_0 = arith.constant 0 : i32
    %c0_i32_1 = arith.constant 0 : i32
    return %c0_i32, %c0_i32_0 : i32, i32
  }
}

</mosaic_0001>

<llo_original>
// kernel: tpu_custom_call.1
$region0: #{tpu_custom_call.1}
  #allocation0 [shape = 'u32[]', space=smem, size = 0x4, offset = 0x4, fixed_abs, tag = 'smem constant byte address 0x4 - core index']
  #allocation1 [shape = 'u32[144,128]{1,0:T(1,128)}', space=vmem, size = 0x12000, scoped, tag = 'internal scratch']
  #allocation2 [shape = 'f32[1,128]{1,0:T(1,128)}', space=vmem, size = 0x200, scoped, tag = 'scratch operand']
  %s0 = inlined_call_operand.vmem [shape: bf16[50,16], index: 0, kind: input, shape index: {}]
  %s1 = inlined_call_operand.hbm [shape: bf16[16,128], index: 1, kind: input, shape index: {}]
  %s2 = inlined_call_operand.vmem [shape: f32[1,128], index: 2, kind: input, shape index: {}]
  %s3 = inlined_call_operand.vmem [shape: f32[1,128], index: 3, kind: input, shape index: {}]
  %s4 = inlined_call_operand.vmem [shape: f32[1,128], index: 4, kind: input, shape index: {}]
  %s5 = inlined_call_operand.hbm [shape: bf16[128,128], index: 5, kind: input, shape index: {}]
  %s6 = inlined_call_operand.vmem [shape: f32[1,128], index: 6, kind: input, shape index: {}]
  %s7 = inlined_call_operand.vmem [shape: f32[1,128], index: 7, kind: input, shape index: {}]
  %s8 = inlined_call_operand.vmem [shape: f32[1,128], index: 8, kind: input, shape index: {}]
  %s9 = inlined_call_operand.vmem [shape: bf16[128,128], index: 9, kind: input, shape index: {}]
  %s10 = inlined_call_operand.vmem [shape: f32[1,128], index: 10, kind: input, shape index: {}]
  %s11 = inlined_call_operand.vmem [shape: f32[1,128], index: 11, kind: input, shape index: {}]
  %s12 = inlined_call_operand.vmem [shape: f32[1,128], index: 12, kind: input, shape index: {}]
  %s13 = inlined_call_operand.hbm [shape: bf16[128,128], index: 13, kind: input, shape index: {}]
  %s14 = inlined_call_operand.vmem [shape: f32[1,128], index: 14, kind: input, shape index: {}]
  %s15 = inlined_call_operand.hbm [shape: f32[1,128], index: 15, kind: output, shape index: {}]
  %s16 = sld [smem:[#allocation0]]
  $region113: #{tpu_custom_call.1} parent=0
    _
  %s18 = ssub.s32 1, %s16
  %s19 = scalar_select 0, %s18, %s16
  $region1: #{tpu_custom_call.1} parent=0
    #allocation3 [shape = 'u8[4096]{0}', space=vmem, size = 0x1000, scoped, tag = 'input window, operand 1, single buffered']
    #allocation4 [shape = 's32[2]{0}', space=sflag, size = 0x8, scoped, tag = 'scoped memory for tpu_custom_call.1']
    #allocation5 [shape = 's32[2]{0}', space=sflag, size = 0x8, scoped, tag = 'scoped memory for tpu_custom_call.1']
    #allocation6 [shape = 'u8[32768]{0}', space=vmem, size = 0x8000, scoped, tag = 'input window, operand 5, single buffered']
    #allocation7 [shape = 's32[1]{0}', space=sflag, size = 0x4, scoped, tag = 'scoped memory for tpu_custom_call.1']
    #allocation8 [shape = 'u8[32768]{0}', space=vmem, size = 0x8000, scoped, tag = 'input window, operand 13, single buffered']
    #allocation9 [shape = 'u8[512]{0}', space=vmem, size = 0x400, scoped, tag = 'output window, operand 0, single buffered']
    %20 = vsyncpa [#allocation4], 0
    %21 = vsyncpa [#allocation7], 0
    %22 = vsyncpa [#allocation5], 0
    loop: start=0, step=1, limit=6
    $region2: #{tpu_custom_call.1} parent=1 // loop_pre_header
      _
    $region3: #{tpu_custom_call.1} parent=1 // loop_header
      %s24 = sphi 0, %s28
      %p25 = scmp.ge.s32.totalorder %s24, 6
      %s34 = sphi 0, %s36
      %s37 = sphi 0, %s34
      %s38 = sphi 0, %s37
      %s54 = sphi 0, %s38
      %s58 = sphi 0, %s58
      %s60 = sphi 0, %s58
      %s61 = sphi 0, %s60
      %s75 = sphi 0, %s61
      %s79 = sphi 0, %s79
      %s81 = sphi 0, %s79
      %s82 = sphi 0, %s81
      %s96 = sphi 0, %s82
      %s100 = sphi 0, %s100
      %s102 = sphi 0, %s100
      %s103 = sphi 0, %s102
      %s117 = sphi 0, %s103
      %s121 = sphi 0, %s121
      %s123 = sphi 0, %s121
      %s124 = sphi 0, %s123
      %s138 = sphi 0, %s124
      %s142 = sphi 0, %s142
      %s144 = sphi 0, %s142
      %s145 = sphi 0, %s144
      %s159 = sphi 0, %s145
      %s163 = sphi 0, %s163
      %s165 = sphi 0, %s163
      %s166 = sphi 0, %s165
      %s180 = sphi 0, %s166
      %s184 = sphi 0, %s184
      %s186 = sphi 0, %s184
      %s187 = sphi 0, %s186
      %s201 = sphi 0, %s187
      %s205 = sphi 0, %s205
      %s207 = sphi 0, %s205
      %s208 = sphi 0, %s207
      %s222 = sphi 0, %s208
      %s226 = sphi 0, %s226
      %s228 = sphi 0, %s226
      %s229 = sphi 0, %s228
      %s243 = sphi 0, %s229
      %s247 = sphi 0, %s247
      %s249 = sphi 0, %s247
      %s250 = sphi 0, %s249
      %s264 = sphi 0, %s250
      %s268 = sphi 0, %s268
      %s270 = sphi 0, %s268
      %s271 = sphi 0, %s270
      %s285 = sphi 0, %s271
      %s289 = sphi 0, %s289
      %s291 = sphi 0, %s289
      %s292 = sphi 0, %s291
      %s306 = sphi 0, %s292
      %s310 = sphi 0, %s310
      %s312 = sphi 0, %s310
      %s313 = sphi 0, %s312
      %s327 = sphi 0, %s313
      %s331 = sphi 0, %s331
      %s333 = sphi 0, %s331
      %s334 = sphi 0, %s333
      %s348 = sphi 0, %s334
      %s352 = sphi 0, %s352
      %s354 = sphi 0, %s352
      %s355 = sphi 0, %s354
      %s369 = sphi 0, %s355
    $region4: #{tpu_custom_call.1} parent=1 // loop_header_branch
      %27 = sbr.rel (%p25) target = $region8
    $region5: #{tpu_custom_call.1} parent=1 // loop_body
      %s29 = ssub.s32 %s24, 1
      %s30 = ssub.s32 %s24, 2
      %s31 = sadd.s32 %s24, 1
      %s32 = ssub.s32 %s24, %s31
      %p33 = scmp.eq.s32.totalorder %s32, 0
      %s35 = sadd.s32 %s34, 1
      %s36 = scalar_select %p33, %s34, %s35
      %p39 = pneg %p33
      %p40 = scmp.eq.s32.totalorder %s24, 3
      %p41 = por %p39, %p40
      %p42 = scmp.ne.s32.totalorder %s34, %s37
      %p43 = scmp.eq.s32.totalorder %s24, 0
      %p44 = por %p42, %p43
      %p45 = scmp.ne.s32.totalorder %s34, %s37
      %p46 = scmp.eq.s32.totalorder %s29, 3
      %p47 = por %p45, %p46
      %p48 = scmp.ne.s32.totalorder %s37, %s38
      %p49 = scmp.eq.s32.totalorder %s29, 0
      %p50 = por %p48, %p49
      %p51 = scmp.ne.s32.totalorder %s37, %s38
      %p52 = scmp.eq.s32.totalorder %s30, 3
      %p53 = por %p51, %p52
      %p55 = scmp.ne.s32.totalorder %s38, %s54
      %p56 = scmp.eq.s32.totalorder %s30, 0
      %p57 = por %p55, %p56
      %s59 = sadd.s32 %s58, 1
      %p62 = scmp.eq.s32.totalorder %s24, 3
      %p63 = scmp.ne.s32.totalorder %s58, %s60
      %p64 = scmp.eq.s32.totalorder %s24, 0
      %p65 = por %p63, %p64
      %p66 = scmp.ne.s32.totalorder %s58, %s60
      %p67 = scmp.eq.s32.totalorder %s29, 3
      %p68 = por %p66, %p67
      %p69 = scmp.ne.s32.totalorder %s60, %s61
      %p70 = scmp.eq.s32.totalorder %s29, 0
      %p71 = por %p69, %p70
      %p72 = scmp.ne.s32.totalorder %s60, %s61
      %p73 = scmp.eq.s32.totalorder %s30, 3
      %p74 = por %p72, %p73
      %p76 = scmp.ne.s32.totalorder %s61, %s75
      %p77 = scmp.eq.s32.totalorder %s30, 0
      %p78 = por %p76, %p77
      %s80 = sadd.s32 %s79, 1
      %p83 = scmp.eq.s32.totalorder %s24, 3
      %p84 = scmp.ne.s32.totalorder %s79, %s81
      %p85 = scmp.eq.s32.totalorder %s24, 0
      %p86 = por %p84, %p85
      %p87 = scmp.ne.s32.totalorder %s79, %s81
      %p88 = scmp.eq.s32.totalorder %s29, 3
      %p89 = por %p87, %p88
      %p90 = scmp.ne.s32.totalorder %s81, %s82
      %p91 = scmp.eq.s32.totalorder %s29, 0
      %p92 = por %p90, %p91
      %p93 = scmp.ne.s32.totalorder %s81, %s82
      %p94 = scmp.eq.s32.totalorder %s30, 3
      %p95 = por %p93, %p94
      %p97 = scmp.ne.s32.totalorder %s82, %s96
      %p98 = scmp.eq.s32.totalorder %s30, 0
      %p99 = por %p97, %p98
      %s101 = sadd.s32 %s100, 1
      %p104 = scmp.eq.s32.totalorder %s24, 3
      %p105 = scmp.ne.s32.totalorder %s100, %s102
      %p106 = scmp.eq.s32.totalorder %s24, 0
      %p107 = por %p105, %p106
      %p108 = scmp.ne.s32.totalorder %s100, %s102
      %p109 = scmp.eq.s32.totalorder %s29, 3
      %p110 = por %p108, %p109
      %p111 = scmp.ne.s32.totalorder %s102, %s103
      %p112 = scmp.eq.s32.totalorder %s29, 0
      %p113 = por %p111, %p112
      %p114 = scmp.ne.s32.totalorder %s102, %s103
      %p115 = scmp.eq.s32.totalorder %s30, 3
      %p116 = por %p114, %p115
      %p118 = scmp.ne.s32.totalorder %s103, %s117
      %p119 = scmp.eq.s32.totalorder %s30, 0
      %p120 = por %p118, %p119
      %s122 = sadd.s32 %s121, 1
      %p125 = scmp.eq.s32.totalorder %s24, 3
      %p126 = scmp.ne.s32.totalorder %s121, %s123
      %p127 = scmp.eq.s32.totalorder %s24, 0
      %p128 = por %p126, %p127
      %p129 = scmp.ne.s32.totalorder %s121, %s123
      %p130 = scmp.eq.s32.totalorder %s29, 3
      %p131 = por %p129, %p130
      %p132 = scmp.ne.s32.totalorder %s123, %s124
      %p133 = scmp.eq.s32.totalorder %s29, 0
      %p134 = por %p132, %p133
      %p135 = scmp.ne.s32.totalorder %s123, %s124
      %p136 = scmp.eq.s32.totalorder %s30, 3
      %p137 = por %p135, %p136
      %p139 = scmp.ne.s32.totalorder %s124, %s138
      %p140 = scmp.eq.s32.totalorder %s30, 0
      %p141 = por %p139, %p140
      %s143 = sadd.s32 %s142, 1
      %p146 = scmp.eq.s32.totalorder %s24, 3
      %p147 = scmp.ne.s32.totalorder %s142, %s144
      %p148 = scmp.eq.s32.totalorder %s24, 0
      %p149 = por %p147, %p148
      %p150 = scmp.ne.s32.totalorder %s142, %s144
      %p151 = scmp.eq.s32.totalorder %s29, 3
      %p152 = por %p150, %p151
      %p153 = scmp.ne.s32.totalorder %s144, %s145
      %p154 = scmp.eq.s32.totalorder %s29, 0
      %p155 = por %p153, %p154
      %p156 = scmp.ne.s32.totalorder %s144, %s145
      %p157 = scmp.eq.s32.totalorder %s30, 3
      %p158 = por %p156, %p157
      %p160 = scmp.ne.s32.totalorder %s145, %s159
      %p161 = scmp.eq.s32.totalorder %s30, 0
      %p162 = por %p160, %p161
      %s164 = sadd.s32 %s163, 1
      %p167 = scmp.eq.s32.totalorder %s24, 3
      %p168 = scmp.ne.s32.totalorder %s163, %s165
      %p169 = scmp.eq.s32.totalorder %s24, 0
      %p170 = por %p168, %p169
      %p171 = scmp.ne.s32.totalorder %s163, %s165
      %p172 = scmp.eq.s32.totalorder %s29, 3
      %p173 = por %p171, %p172
      %p174 = scmp.ne.s32.totalorder %s165, %s166
      %p175 = scmp.eq.s32.totalorder %s29, 0
      %p176 = por %p174, %p175
      %p177 = scmp.ne.s32.totalorder %s165, %s166
      %p178 = scmp.eq.s32.totalorder %s30, 3
      %p179 = por %p177, %p178
      %p181 = scmp.ne.s32.totalorder %s166, %s180
      %p182 = scmp.eq.s32.totalorder %s30, 0
      %p183 = por %p181, %p182
      %s185 = sadd.s32 %s184, 1
      %p188 = scmp.eq.s32.totalorder %s24, 3
      %p189 = scmp.ne.s32.totalorder %s184, %s186
      %p190 = scmp.eq.s32.totalorder %s24, 0
      %p191 = por %p189, %p190
      %p192 = scmp.ne.s32.totalorder %s184, %s186
      %p193 = scmp.eq.s32.totalorder %s29, 3
      %p194 = por %p192, %p193
      %p195 = scmp.ne.s32.totalorder %s186, %s187
      %p196 = scmp.eq.s32.totalorder %s29, 0
      %p197 = por %p195, %p196
      %p198 = scmp.ne.s32.totalorder %s186, %s187
      %p199 = scmp.eq.s32.totalorder %s30, 3
      %p200 = por %p198, %p199
      %p202 = scmp.ne.s32.totalorder %s187, %s201
      %p203 = scmp.eq.s32.totalorder %s30, 0
      %p204 = por %p202, %p203
      %s206 = sadd.s32 %s205, 1
      %p209 = scmp.eq.s32.totalorder %s24, 3
      %p210 = scmp.ne.s32.totalorder %s205, %s207
      %p211 = scmp.eq.s32.totalorder %s24, 0
      %p212 = por %p210, %p211
      %p213 = scmp.ne.s32.totalorder %s205, %s207
      %p214 = scmp.eq.s32.totalorder %s29, 3
      %p215 = por %p213, %p214
      %p216 = scmp.ne.s32.totalorder %s207, %s208
      %p217 = scmp.eq.s32.totalorder %s29, 0
      %p218 = por %p216, %p217
      %p219 = scmp.ne.s32.totalorder %s207, %s208
      %p220 = scmp.eq.s32.totalorder %s30, 3
      %p221 = por %p219, %p220
      %p223 = scmp.ne.s32.totalorder %s208, %s222
      %p224 = scmp.eq.s32.totalorder %s30, 0
      %p225 = por %p223, %p224
      %s227 = sadd.s32 %s226, 1
      %p230 = scmp.eq.s32.totalorder %s24, 3
      %p231 = scmp.ne.s32.totalorder %s226, %s228
      %p232 = scmp.eq.s32.totalorder %s24, 0
      %p233 = por %p231, %p232
      %p234 = scmp.ne.s32.totalorder %s226, %s228
      %p235 = scmp.eq.s32.totalorder %s29, 3
      %p236 = por %p234, %p235
      %p237 = scmp.ne.s32.totalorder %s228, %s229
      %p238 = scmp.eq.s32.totalorder %s29, 0
      %p239 = por %p237, %p238
      %p240 = scmp.ne.s32.totalorder %s228, %s229
      %p241 = scmp.eq.s32.totalorder %s30, 3
      %p242 = por %p240, %p241
      %p244 = scmp.ne.s32.totalorder %s229, %s243
      %p245 = scmp.eq.s32.totalorder %s30, 0
      %p246 = por %p244, %p245
      %s248 = sadd.s32 %s247, 1
      %p251 = scmp.eq.s32.totalorder %s24, 3
      %p252 = scmp.ne.s32.totalorder %s247, %s249
      %p253 = scmp.eq.s32.totalorder %s24, 0
      %p254 = por %p252, %p253
      %p255 = scmp.ne.s32.totalorder %s247, %s249
      %p256 = scmp.eq.s32.totalorder %s29, 3
      %p257 = por %p255, %p256
      %p258 = scmp.ne.s32.totalorder %s249, %s250
      %p259 = scmp.eq.s32.totalorder %s29, 0
      %p260 = por %p258, %p259
      %p261 = scmp.ne.s32.totalorder %s249, %s250
      %p262 = scmp.eq.s32.totalorder %s30, 3
      %p263 = por %p261, %p262
      %p265 = scmp.ne.s32.totalorder %s250, %s264
      %p266 = scmp.eq.s32.totalorder %s30, 0
      %p267 = por %p265, %p266
      %s269 = sadd.s32 %s268, 1
      %p272 = scmp.eq.s32.totalorder %s24, 3
      %p273 = scmp.ne.s32.totalorder %s268, %s270
      %p274 = scmp.eq.s32.totalorder %s24, 0
      %p275 = por %p273, %p274
      %p276 = scmp.ne.s32.totalorder %s268, %s270
      %p277 = scmp.eq.s32.totalorder %s29, 3
      %p278 = por %p276, %p277
      %p279 = scmp.ne.s32.totalorder %s270, %s271
      %p280 = scmp.eq.s32.totalorder %s29, 0
      %p281 = por %p279, %p280
      %p282 = scmp.ne.s32.totalorder %s270, %s271
      %p283 = scmp.eq.s32.totalorder %s30, 3
      %p284 = por %p282, %p283
      %p286 = scmp.ne.s32.totalorder %s271, %s285
      %p287 = scmp.eq.s32.totalorder %s30, 0
      %p288 = por %p286, %p287
      %s290 = sadd.s32 %s289, 1
      %p293 = scmp.eq.s32.totalorder %s24, 3
      %p294 = scmp.ne.s32.totalorder %s289, %s291
      %p295 = scmp.eq.s32.totalorder %s24, 0
      %p296 = por %p294, %p295
      %p297 = scmp.ne.s32.totalorder %s289, %s291
      %p298 = scmp.eq.s32.totalorder %s29, 3
      %p299 = por %p297, %p298
      %p300 = scmp.ne.s32.totalorder %s291, %s292
      %p301 = scmp.eq.s32.totalorder %s29, 0
      %p302 = por %p300, %p301
      %p303 = scmp.ne.s32.totalorder %s291, %s292
      %p304 = scmp.eq.s32.totalorder %s30, 3
      %p305 = por %p303, %p304
      %p307 = scmp.ne.s32.totalorder %s292, %s306
      %p308 = scmp.eq.s32.totalorder %s30, 0
      %p309 = por %p307, %p308
      %s311 = sadd.s32 %s310, 1
      %p314 = scmp.eq.s32.totalorder %s24, 3
      %p315 = scmp.ne.s32.totalorder %s310, %s312
      %p316 = scmp.eq.s32.totalorder %s24, 0
      %p317 = por %p315, %p316
      %p318 = scmp.ne.s32.totalorder %s310, %s312
      %p319 = scmp.eq.s32.totalorder %s29, 3
      %p320 = por %p318, %p319
      %p321 = scmp.ne.s32.totalorder %s312, %s313
      %p322 = scmp.eq.s32.totalorder %s29, 0
      %p323 = por %p321, %p322
      %p324 = scmp.ne.s32.totalorder %s312, %s313
      %p325 = scmp.eq.s32.totalorder %s30, 3
      %p326 = por %p324, %p325
      %p328 = scmp.ne.s32.totalorder %s313, %s327
      %p329 = scmp.eq.s32.totalorder %s30, 0
      %p330 = por %p328, %p329
      %s332 = sadd.s32 %s331, 1
      %p335 = scmp.eq.s32.totalorder %s24, 3
      %p336 = scmp.ne.s32.totalorder %s331, %s333
      %p337 = scmp.eq.s32.totalorder %s24, 0
      %p338 = por %p336, %p337
      %p339 = scmp.ne.s32.totalorder %s331, %s333
      %p340 = scmp.eq.s32.totalorder %s29, 3
      %p341 = por %p339, %p340
      %p342 = scmp.ne.s32.totalorder %s333, %s334
      %p343 = scmp.eq.s32.totalorder %s29, 0
      %p344 = por %p342, %p343
      %p345 = scmp.ne.s32.totalorder %s333, %s334
      %p346 = scmp.eq.s32.totalorder %s30, 3
      %p347 = por %p345, %p346
      %p349 = scmp.ne.s32.totalorder %s334, %s348
      %p350 = scmp.eq.s32.totalorder %s30, 0
      %p351 = por %p349, %p350
      %s353 = sadd.s32 %s352, 1
      %p356 = scmp.eq.s32.totalorder %s24, 3
      %p357 = scmp.ne.s32.totalorder %s352, %s354
      %p358 = scmp.eq.s32.totalorder %s24, 0
      %p359 = por %p357, %p358
      %p360 = scmp.ne.s32.totalorder %s352, %s354
      %p361 = scmp.eq.s32.totalorder %s29, 3
      %p362 = por %p360, %p361
      %p363 = scmp.ne.s32.totalorder %s354, %s355
      %p364 = scmp.eq.s32.totalorder %s29, 0
      %p365 = por %p363, %p364
      %p366 = scmp.ne.s32.totalorder %s354, %s355
      %p367 = scmp.eq.s32.totalorder %s30, 3
      %p368 = por %p366, %p367
      %p370 = scmp.ne.s32.totalorder %s355, %s369
      %p371 = scmp.eq.s32.totalorder %s30, 0
      %p372 = por %p370, %p371
      %p373 = scmp.le.s32.totalorder 1, %s24
      %p374 = scmp.lt.s32.totalorder %s24, 5
      %p375 = pnand %p373, %p374
      %p376 = pneg %p375
      // Predicated region
      $region9: #{tpu_custom_call.1} parent=5 // pred_check
        _
      $region10: #{tpu_custom_call.1} parent=5 // pred_check_branch
        %378 = sbr.rel (%p375) target = $region12
      $region11: #{tpu_custom_call.1} parent=5 // pred_region
        %s379 = ssub.s32 %s24, 1
        // Predicated region
        $region13: #{tpu_custom_call.1} parent=11 // pred_check
          %p380 = pneg %p71
        $region14: #{tpu_custom_call.1} parent=11 // pred_check_branch
          %382 = sbr.rel (%p380) target = $region16
        $region15: #{tpu_custom_call.1} parent=11 // pred_region
          %s384 = ssub.s32 128, 128
          %385 = vsyncadd [#allocation4], %s384
          %s386 = sshll.u32 [#allocation3], 4
          %s387 = int_to_ptr.vmem [resolvable:$true] %s386
          %392 = dma.hbm_to_vmem [thread:$0]  %s1, 128, %s387, [#allocation4], 64, 64, 4
        $region16: #{tpu_custom_call.1} parent=11 // pred_fallthru
          _
        // Predicated region
        $region17: #{tpu_custom_call.1} parent=11 // pred_check
          %p393 = pneg %p92
        $region18: #{tpu_custom_call.1} parent=11 // pred_check_branch
          %395 = sbr.rel (%p393) target = $region20
        $region19: #{tpu_custom_call.1} parent=11 // pred_region
          _
        $region20: #{tpu_custom_call.1} parent=11 // pred_fallthru
          _
        // Predicated region
        $region21: #{tpu_custom_call.1} parent=11 // pred_check
          %p396 = pneg %p113
        $region22: #{tpu_custom_call.1} parent=11 // pred_check_branch
          %398 = sbr.rel (%p396) target = $region24
        $region23: #{tpu_custom_call.1} parent=11 // pred_region
          _
        $region24: #{tpu_custom_call.1} parent=11 // pred_fallthru
          _
        // Predicated region
        $region25: #{tpu_custom_call.1} parent=11 // pred_check
          %p399 = pneg %p134
        $region26: #{tpu_custom_call.1} parent=11 // pred_check_branch
          %401 = sbr.rel (%p399) target = $region28
        $region27: #{tpu_custom_call.1} parent=11 // pred_region
          _
        $region28: #{tpu_custom_call.1} parent=11 // pred_fallthru
          _
        // Predicated region
        $region29: #{tpu_custom_call.1} parent=11 // pred_check
          %p402 = pneg %p155
        $region30: #{tpu_custom_call.1} parent=11 // pred_check_branch
          %404 = sbr.rel (%p402) target = $region32
        $region31: #{tpu_custom_call.1} parent=11 // pred_region
          %s406 = ssub.s32 1024, 1024
          %407 = vsyncadd [#allocation7], %s406
          %s408 = sshll.u32 [#allocation6], 4
          %s409 = int_to_ptr.vmem [resolvable:$true] %s408
          %414 = dma.hbm_to_vmem [thread:$0]  %s5, 1024, %s409, [#allocation7], 64, 64, 4
        $region32: #{tpu_custom_call.1} parent=11 // pred_fallthru
          _
        // Predicated region
        $region33: #{tpu_custom_call.1} parent=11 // pred_check
          %p415 = pneg %p176
        $region34: #{tpu_custom_call.1} parent=11 // pred_check_branch
          %417 = sbr.rel (%p415) target = $region36
        $region35: #{tpu_custom_call.1} parent=11 // pred_region
          _
        $region36: #{tpu_custom_call.1} parent=11 // pred_fallthru
          _
        // Predicated region
        $region37: #{tpu_custom_call.1} parent=11 // pred_check
          %p418 = pneg %p197
        $region38: #{tpu_custom_call.1} parent=11 // pred_check_branch
          %420 = sbr.rel (%p418) target = $region40
        $region39: #{tpu_custom_call.1} parent=11 // pred_region
          _
        $region40: #{tpu_custom_call.1} parent=11 // pred_fallthru
          _
        // Predicated region
        $region41: #{tpu_custom_call.1} parent=11 // pred_check
          %p421 = pneg %p218
        $region42: #{tpu_custom_call.1} parent=11 // pred_check_branch
          %423 = sbr.rel (%p421) target = $region44
        $region43: #{tpu_custom_call.1} parent=11 // pred_region
          _
        $region44: #{tpu_custom_call.1} parent=11 // pred_fallthru
          _
        // Predicated region
        $region45: #{tpu_custom_call.1} parent=11 // pred_check
          %p424 = pneg %p239
        $region46: #{tpu_custom_call.1} parent=11 // pred_check_branch
          %426 = sbr.rel (%p424) target = $region48
        $region47: #{tpu_custom_call.1} parent=11 // pred_region
          _
        $region48: #{tpu_custom_call.1} parent=11 // pred_fallthru
          _
        // Predicated region
        $region49: #{tpu_custom_call.1} parent=11 // pred_check
          %p427 = pneg %p260
        $region50: #{tpu_custom_call.1} parent=11 // pred_check_branch
          %429 = sbr.rel (%p427) target = $region52
        $region51: #{tpu_custom_call.1} parent=11 // pred_region
          _
        $region52: #{tpu_custom_call.1} parent=11 // pred_fallthru
          _
        // Predicated region
        $region53: #{tpu_custom_call.1} parent=11 // pred_check
          %p430 = pneg %p281
        $region54: #{tpu_custom_call.1} parent=11 // pred_check_branch
          %432 = sbr.rel (%p430) target = $region56
        $region55: #{tpu_custom_call.1} parent=11 // pred_region
          _
        $region56: #{tpu_custom_call.1} parent=11 // pred_fallthru
          _
        // Predicated region
        $region57: #{tpu_custom_call.1} parent=11 // pred_check
          %p433 = pneg %p302
        $region58: #{tpu_custom_call.1} parent=11 // pred_check_branch
          %435 = sbr.rel (%p433) target = $region60
        $region59: #{tpu_custom_call.1} parent=11 // pred_region
          _
        $region60: #{tpu_custom_call.1} parent=11 // pred_fallthru
          _
        // Predicated region
        $region61: #{tpu_custom_call.1} parent=11 // pred_check
          %p436 = pneg %p323
        $region62: #{tpu_custom_call.1} parent=11 // pred_check_branch
          %438 = sbr.rel (%p436) target = $region64
        $region63: #{tpu_custom_call.1} parent=11 // pred_region
          %s440 = ssub.s32 1024, 1024
          %441 = vsyncadd [#allocation7], %s440
          %s442 = sshll.u32 [#allocation8], 4
          %s443 = int_to_ptr.vmem [resolvable:$true] %s442
          %448 = dma.hbm_to_vmem [thread:$0]  %s13, 1024, %s443, [#allocation7], 64, 64, 4
        $region64: #{tpu_custom_call.1} parent=11 // pred_fallthru
          _
        // Predicated region
        $region65: #{tpu_custom_call.1} parent=11 // pred_check
          %p449 = pneg %p344
        $region66: #{tpu_custom_call.1} parent=11 // pred_check_branch
          %451 = sbr.rel (%p449) target = $region68
        $region67: #{tpu_custom_call.1} parent=11 // pred_region
          _
        $region68: #{tpu_custom_call.1} parent=11 // pred_fallthru
          _
      $region12: #{tpu_custom_call.1} parent=5 // pred_fallthru
        _
      %p452 = scmp.lt.s32.totalorder %s24, 4
      // Predicated region
      $region69: #{tpu_custom_call.1} parent=5 // pred_check
        %p453 = pneg %p452
      $region70: #{tpu_custom_call.1} parent=5 // pred_check_branch
        %455 = sbr.rel (%p453) target = $region72
      $region71: #{tpu_custom_call.1} parent=5 // pred_region
        // Predicated region
        $region73: #{tpu_custom_call.1} parent=71 // pred_check
          %p456 = pneg %p44
        $region74: #{tpu_custom_call.1} parent=71 // pred_check_branch
          %458 = sbr.rel (%p456) target = $region76
        $region75: #{tpu_custom_call.1} parent=71 // pred_region
          %s459 = smul.u32 2, %s24
          %s460 = ssub.s32 7, %s459
          %p461 = scmp.lt.s32.totalorder %s460, 2
          %s462 = scalar_select %p461, %s460, 2
          %s463 = smul.u32 64, %s462
          %p464 = scmp.lt.s32.totalorder %s459, 6
          %s465 = scalar_select %p464, %s459, 6
          %s466 = smul.addr %s465, 4
          %s467 = scalar_lea.vmem %s0, %s466
          %s468 = smul.u32 2, %s24
          %s469 = ssub.s32 7, %s468
          %p470 = scmp.lt.s32.totalorder %s469, 2
          %s471 = scalar_select %p470, %s469, 2
          %s472 = smul.u32 64, %s471
        $region76: #{tpu_custom_call.1} parent=71 // pred_fallthru
          _
      $region72: #{tpu_custom_call.1} parent=5 // pred_fallthru
        _
      %p473 = scmp.le.s32.totalorder 1, %s24
      %p474 = scmp.lt.s32.totalorder %s24, 5
      %p475 = pnand %p473, %p474
      %p476 = pneg %p475
      // Predicated region
      $region77: #{tpu_custom_call.1} parent=5 // pred_check
        _
      $region78: #{tpu_custom_call.1} parent=5 // pred_check_branch
        %478 = sbr.rel (%p475) target = $region80
      $region79: #{tpu_custom_call.1} parent=5 // pred_region
        %s479 = ssub.s32 %s24, 1
        // Predicated region
        $region81: #{tpu_custom_call.1} parent=79 // pred_check
          %p480 = pneg %p71
        $region82: #{tpu_custom_call.1} parent=79 // pred_check_branch
          %482 = sbr.rel (%p480) target = $region84
        $region83: #{tpu_custom_call.1} parent=79 // pred_region
          %483 = dma.done [#allocation4], 128
        $region84: #{tpu_custom_call.1} parent=79 // pred_fallthru
          _
        // Predicated region
        $region85: #{tpu_custom_call.1} parent=79 // pred_check
          %p484 = pneg %p155
        $region86: #{tpu_custom_call.1} parent=79 // pred_check_branch
          %486 = sbr.rel (%p484) target = $region88
        $region87: #{tpu_custom_call.1} parent=79 // pred_region
          %487 = dma.done [#allocation7], 1024
        $region88: #{tpu_custom_call.1} parent=79 // pred_fallthru
          _
        // Predicated region
        $region89: #{tpu_custom_call.1} parent=79 // pred_check
          %p488 = pneg %p323
        $region90: #{tpu_custom_call.1} parent=79 // pred_check_branch
          %490 = sbr.rel (%p488) target = $region92
        $region91: #{tpu_custom_call.1} parent=79 // pred_region
          %491 = dma.done [#allocation7], 1024
        $region92: #{tpu_custom_call.1} parent=79 // pred_fallthru
          _
        %s492 = smul.u32 2, %s29
        %s493 = ssub.s32 7, %s492
        %p494 = scmp.lt.s32.totalorder %s493, 2
        %s495 = scalar_select %p494, %s493, 2
        %s496 = smul.u32 64, %s495
        %p497 = scmp.lt.s32.totalorder %s492, 6
        %s498 = scalar_select %p497, %s492, 6
        %s499 = smul.addr %s498, 4
        %s500 = scalar_lea.vmem %s0, %s499
        %p501 = pneg %p50
        %p502 = pneg %p47
        %p503 = pneg %p71
        %p504 = pneg %p68
        %p505 = pneg %p92
        %p506 = pneg %p89
        %p507 = pneg %p113
        %p508 = pneg %p110
        %p509 = pneg %p134
        %p510 = pneg %p131
        %p511 = pneg %p155
        %p512 = pneg %p152
        %p513 = pneg %p176
        %p514 = pneg %p173
        %p515 = pneg %p197
        %p516 = pneg %p194
        %p517 = pneg %p218
        %p518 = pneg %p215
        %p519 = pneg %p239
        %p520 = pneg %p236
        %p521 = pneg %p260
        %p522 = pneg %p257
        %p523 = pneg %p281
        %p524 = pneg %p278
        %p525 = pneg %p302
        %p526 = pneg %p299
        %p527 = pneg %p323
        %p528 = pneg %p320
        %p529 = pneg %p344
        %p530 = pneg %p341
        %p531 = pneg %p365
        %p532 = pneg %p362
        %s533 = smul.u32 2, %s29
        %s534 = ssub.s32 7, %s533
        %p535 = scmp.lt.s32.totalorder %s534, 2
        %s536 = scalar_select %p535, %s534, 2
        %s537 = smul.u32 64, %s536
        %p538 = scmp.lt.s32.totalorder %s533, 6
        %s539 = scalar_select %p538, %s533, 6
        %s540 = smul.addr %s539, 4
        %s541 = scalar_lea.vmem %s0, %s540
        %s542 = smul.u32 2, %s29
        %s543 = ssub.s32 7, %s542
        %p544 = scmp.lt.s32.totalorder %s543, 2
        %s545 = scalar_select %p544, %s543, 2
        %s546 = smul.u32 64, %s545
        %p548 = scmp.eq.s32.totalorder %s29, 0
        // Predicated region
        $region93: #{tpu_custom_call.1} parent=79 // pred_check
          %p549 = pneg %p548
        $region94: #{tpu_custom_call.1} parent=79 // pred_check_branch
          %551 = sbr.rel (%p549) target = $region96
        $region95: #{tpu_custom_call.1} parent=79 // pred_region
          %552 = vst [vmem:[#allocation2] sm:$0x1] 0.0
        $region96: #{tpu_custom_call.1} parent=79 // pred_fallthru
          _
        %v553 = vld [vmem:[%s541] sm:$0xf]
        %v554 = vld [vmem:[%s541 + $0x4] sm:$0xf]
        %v555 = vld [vmem:[#allocation3] sm:$0xf]
        %v556 = vld [vmem:[#allocation3 + $0x4] sm:$0xf]
        %v557 = vld [vmem:[%s2] sm:$0x1]
        %v559 = vlaneseq
        %v560 = vshrl.u32 %v559, 7
        %v561 = vsub.s32 0, %v560
        %v562 = vrot.slane %v557, %v561
        %v566 = vunpack.c.l.b16 %v553
        %v567 = vunpack.c.l.b16 %v554
        %v568 = vpack.c.b16 %v567, %v566
        %v571 = vunpack.c.l.b16 %v555
        %v572 = vunpack.c.l.b16 %v556
        %v573 = vpack.c.b16 %v572, %v571
        %vm575 = vcmask 130048
        %v577 = vsel %vm575, %v568, 0
        %579 = vmatprep.subr.bf16.mxu0 0
        %580 = vmatpush1.bf16.msra.mxu0 %v573
        %581 = vmatprep.subr.bf16.mxu0 0
        %582 = vmatpush1.bf16.msra.mxu0 0
        %583 = vmatprep.subr.bf16.mxu0 0
        %584 = vmatpush1.bf16.msra.mxu0 0
        %585 = vmatprep.subr.bf16.mxu0 0
        %586 = vmatpush1.bf16.msra.mxu0 0
        %587 = vmatprep.subr.bf16.mxu0 0
        %588 = vmatpush1.bf16.msra.mxu0 0
        %589 = vmatprep.subr.bf16.mxu0 0
        %590 = vmatpush1.bf16.msra.mxu0 0
        %591 = vmatprep.subr.bf16.mxu0 0
        %592 = vmatpush1.bf16.msra.mxu0 0
        %593 = vmatprep.subr.bf16.mxu0 0
        %594 = vmatpush1.bf16.msra.mxu0 0
        %595 = vmatprep.subr.bf16.mxu0 0
        %596 = vmatpush1.bf16.msra.mxu0 0
        %597 = vmatprep.subr.bf16.mxu0 0
        %598 = vmatpush1.bf16.msra.mxu0 0
        %599 = vmatprep.subr.bf16.mxu0 0
        %600 = vmatpush1.bf16.msra.mxu0 0
        %601 = vmatprep.subr.bf16.mxu0 0
        %602 = vmatpush1.bf16.msra.mxu0 0
        %603 = vmatprep.subr.bf16.mxu0 0
        %604 = vmatpush1.bf16.msra.mxu0 0
        %605 = vmatprep.subr.bf16.mxu0 0
        %606 = vmatpush1.bf16.msra.mxu0 0
        %607 = vmatprep.subr.bf16.mxu0 0
        %608 = vmatpush1.bf16.msra.mxu0 0
        %609 = vmatprep.subr.bf16.mxu0 0
        %610 = vmatpush1.bf16.msra.mxu0 0
        %611 = vmatprep.mubr.bf16.mxu0 0
        %612 = vmatmul.mubr.bf16.gmra.mrb[0].mxu0 %v577
        %v613 = vpop.f32.mrb[0].mxu0
        %v614 = vadd.f32 %v562, %v613
        %v615 = vpop.f32.mrb[0].mxu0
        %v616 = vpop.f32.mrb[0].mxu0
        %v617 = vadd.f32 %v562, %v616
        %v618 = vpop.f32.mrb[0].mxu0
        %619 = vdwg.mxu0
        %v620 = vld [vmem:[%s3] sm:$0x1]
        %v621 = vld [vmem:[%s4] sm:$0x1]
        %622 = vadd.xlane.f32.xlu0 %v614
        %v623 = vpop.xlane.xlu0 %622
        %624 = vadd.xlane.f32.xlu0 %v617
        %v625 = vpop.xlane.xlu0 %624
        %v626 = vmul.f32 %v623, 0.0078125
        %v627 = vmul.f32 %v625, 0.0078125
        %v628 = vsub.f32 %v614, %v626
        %v629 = vsub.f32 %v617, %v627
        %v630 = vmul.f32 %v628, %v628
        %v631 = vmul.f32 %v629, %v629
        %632 = vadd.xlane.f32.xlu0 %v630
        %v633 = vpop.xlane.xlu0 %632
        %634 = vadd.xlane.f32.xlu0 %v631
        %v635 = vpop.xlane.xlu0 %634
        %v636 = vmul.f32 %v633, 0.0078125
        %v637 = vmul.f32 %v635, 0.0078125
        %v638 = vadd.f32 %v636, 1e-05
        %v639 = vadd.f32 %v637, 1e-05
        %v640 = vrsqrt.pop %v638
        %v641 = vrsqrt.pop %v639
        %v642 = vmul.f32 %v628, %v640
        %v643 = vmul.f32 %v629, %v641
        %v645 = vlaneseq
        %v646 = vshrl.u32 %v645, 7
        %v647 = vsub.s32 0, %v646
        %v648 = vrot.slane %v620, %v647
        %v650 = vmul.f32 %v642, %v648
        %v651 = vmul.f32 %v643, %v648
        %v653 = vlaneseq
        %v654 = vshrl.u32 %v653, 7
        %v655 = vsub.s32 0, %v654
        %v656 = vrot.slane %v621, %v655
        %v658 = vadd.f32 %v650, %v656
        %v659 = vadd.f32 %v651, %v656
        %v660 = vmax.f32 %v658, 0.0
        %v661 = vmax.f32 %v659, 0.0
        %v662 = vpack.c.bf16 %v661, %v660
        %v663 = vld [vmem:[#allocation6] sm:$0xf]
        %v664 = vld [vmem:[#allocation6 + $0x4] sm:$0xf]
        %v665 = vld [vmem:[#allocation6 + $0x8] sm:$0xf]
        %v666 = vld [vmem:[#allocation6 + $0xc] sm:$0xf]
        %v667 = vld [vmem:[#allocation6 + $0x10] sm:$0xf]
        %v668 = vld [vmem:[#allocation6 + $0x14] sm:$0xf]
        %v669 = vld [vmem:[#allocation6 + $0x18] sm:$0xf]
        %v670 = vld [vmem:[#allocation6 + $0x1c] sm:$0xf]
        %v671 = vld [vmem:[#allocation6 + $0x20] sm:$0xf]
        %v672 = vld [vmem:[#allocation6 + $0x24] sm:$0xf]
        %v673 = vld [vmem:[#allocation6 + $0x28] sm:$0xf]
        %v674 = vld [vmem:[#allocation6 + $0x2c] sm:$0xf]
        %v675 = vld [vmem:[#allocation6 + $0x30] sm:$0xf]
        %v676 = vld [vmem:[#allocation6 + $0x34] sm:$0xf]
        %v677 = vld [vmem:[#allocation6 + $0x38] sm:$0xf]
        %v678 = vld [vmem:[#allocation6 + $0x3c] sm:$0xf]
        %v679 = vld [vmem:[%s6] sm:$0x1]
        %v681 = vlaneseq
        %v682 = vshrl.u32 %v681, 7
        %v683 = vsub.s32 0, %v682
        %v684 = vrot.slane %v679, %v683
        %v702 = vunpack.c.l.b16 %v663
        %v703 = vunpack.c.l.b16 %v664
        %v704 = vunpack.c.l.b16 %v665
        %v705 = vunpack.c.l.b16 %v666
        %v706 = vunpack.c.l.b16 %v667
        %v707 = vunpack.c.l.b16 %v668
        %v708 = vunpack.c.l.b16 %v669
        %v709 = vunpack.c.l.b16 %v670
        %v710 = vunpack.c.l.b16 %v671
        %v711 = vunpack.c.l.b16 %v672
        %v712 = vunpack.c.l.b16 %v673
        %v713 = vunpack.c.l.b16 %v674
        %v714 = vunpack.c.l.b16 %v675
        %v715 = vunpack.c.l.b16 %v676
        %v716 = vunpack.c.l.b16 %v677
        %v717 = vunpack.c.l.b16 %v678
        %v718 = vpack.c.b16 %v703, %v702
        %v719 = vpack.c.b16 %v705, %v704
        %v720 = vpack.c.b16 %v707, %v706
        %v721 = vpack.c.b16 %v709, %v708
        %v722 = vpack.c.b16 %v711, %v710
        %v723 = vpack.c.b16 %v713, %v712
        %v724 = vpack.c.b16 %v715, %v714
        %v725 = vpack.c.b16 %v717, %v716
        %734 = vmatprep.subr.bf16.mxu0 0
        %735 = vmatpush1.bf16.msra.mxu0 %v718
        %736 = vmatprep.subr.bf16.mxu0 0
        %737 = vmatpush1.bf16.msra.mxu0 %v719
        %738 = vmatprep.subr.bf16.mxu0 0
        %739 = vmatpush1.bf16.msra.mxu0 %v720
        %740 = vmatprep.subr.bf16.mxu0 0
        %741 = vmatpush1.bf16.msra.mxu0 %v721
        %742 = vmatprep.subr.bf16.mxu0 0
        %743 = vmatpush1.bf16.msra.mxu0 %v722
        %744 = vmatprep.subr.bf16.mxu0 0
        %745 = vmatpush1.bf16.msra.mxu0 %v723
        %746 = vmatprep.subr.bf16.mxu0 0
        %747 = vmatpush1.bf16.msra.mxu0 %v724
        %748 = vmatprep.subr.bf16.mxu0 0
        %749 = vmatpush1.bf16.msra.mxu0 %v725
        %750 = vmatprep.subr.bf16.mxu0 0
        %751 = vmatpush1.bf16.msra.mxu0 0
        %752 = vmatprep.subr.bf16.mxu0 0
        %753 = vmatpush1.bf16.msra.mxu0 0
        %754 = vmatprep.subr.bf16.mxu0 0
        %755 = vmatpush1.bf16.msra.mxu0 0
        %756 = vmatprep.subr.bf16.mxu0 0
        %757 = vmatpush1.bf16.msra.mxu0 0
        %758 = vmatprep.subr.bf16.mxu0 0
        %759 = vmatpush1.bf16.msra.mxu0 0
        %760 = vmatprep.subr.bf16.mxu0 0
        %761 = vmatpush1.bf16.msra.mxu0 0
        %762 = vmatprep.subr.bf16.mxu0 0
        %763 = vmatpush1.bf16.msra.mxu0 0
        %764 = vmatprep.subr.bf16.mxu0 0
        %765 = vmatpush1.bf16.msra.mxu0 0
        %766 = vmatprep.mubr.bf16.mxu0 0
        %767 = vmatmul.mubr.bf16.gmra.mrb[0].mxu0 %v662
        %v768 = vpop.f32.mrb[0].mxu0
        %v769 = vadd.f32 %v684, %v768
        %v770 = vpop.f32.mrb[0].mxu0
        %v771 = vpop.f32.mrb[0].mxu0
        %v772 = vadd.f32 %v684, %v771
        %v773 = vpop.f32.mrb[0].mxu0
        %774 = vdwg.mxu0
        %v775 = vld [vmem:[%s7] sm:$0x1]
        %v776 = vld [vmem:[%s8] sm:$0x1]
        %777 = vadd.xlane.f32.xlu0 %v769
        %v778 = vpop.xlane.xlu0 %777
        %779 = vadd.xlane.f32.xlu0 %v772
        %v780 = vpop.xlane.xlu0 %779
        %v781 = vmul.f32 %v778, 0.0078125
        %v782 = vmul.f32 %v780, 0.0078125
        %v783 = vsub.f32 %v769, %v781
        %v784 = vsub.f32 %v772, %v782
        %v785 = vmul.f32 %v783, %v783
        %v786 = vmul.f32 %v784, %v784
        %787 = vadd.xlane.f32.xlu0 %v785
        %v788 = vpop.xlane.xlu0 %787
        %789 = vadd.xlane.f32.xlu0 %v786
        %v790 = vpop.xlane.xlu0 %789
        %v791 = vmul.f32 %v788, 0.0078125
        %v792 = vmul.f32 %v790, 0.0078125
        %v793 = vadd.f32 %v791, 1e-05
        %v794 = vadd.f32 %v792, 1e-05
        %v795 = vrsqrt.pop %v793
        %v796 = vrsqrt.pop %v794
        %v797 = vmul.f32 %v783, %v795
        %v798 = vmul.f32 %v784, %v796
        %v800 = vlaneseq
        %v801 = vshrl.u32 %v800, 7
        %v802 = vsub.s32 0, %v801
        %v803 = vrot.slane %v775, %v802
        %v805 = vmul.f32 %v797, %v803
        %v806 = vmul.f32 %v798, %v803
        %v808 = vlaneseq
        %v809 = vshrl.u32 %v808, 7
        %v810 = vsub.s32 0, %v809
        %v811 = vrot.slane %v776, %v810
        %v813 = vadd.f32 %v805, %v811
        %v814 = vadd.f32 %v806, %v811
        %v815 = vmax.f32 %v813, 0.0
        %v816 = vmax.f32 %v814, 0.0
        %s817 = smul.u32 %s29, 16
        %v818 = vlaneseq
        %v819 = vshrl.u32 %v818, 7
        %v820 = vadd.s32 %v819, 8
        %v821 = vstv %s817
        %v822 = vadd.s32 %v821, %v819
        %v823 = vadd.s32 %v821, %v820
        %vm824 = vcmp.lt.s32.totalorder %v822, 50
        %vm825 = vcmp.lt.s32.totalorder %v823, 50
        %v826 = vsel %vm824, 1, 0
        %v827 = vsel %vm825, 1, 0
        %vm828 = vcmp.eq.s32.totalorder %v826, 1
        %vm829 = vcmp.eq.s32.totalorder %v827, 1
        %v830 = vsel %vm828, %v815, 0.0
        %v831 = vsel %vm829, %v816, 0.0
        %v832 = vld [vmem:[#allocation2] sm:$0x1]
        %v833 = vadd.f32 %v830, %v831
        %v834 = vrot.slane %v833, 4
        %v835 = vadd.f32 %v833, %v834
        %v836 = vrot.slane %v835, 2
        %v837 = vadd.f32 %v835, %v836
        %v838 = vrot.slane %v837, 1
        %v839 = vadd.f32 %v837, %v838
        %v840 = vadd.f32 %v832, %v839
        %841 = vst [vmem:[#allocation2] sm:$0x1] %v840
        %p842 = scmp.eq.s32.totalorder %s29, 3
        // Predicated region
        $region97: #{tpu_custom_call.1} parent=79 // pred_check
          %p843 = pneg %p842
        $region98: #{tpu_custom_call.1} parent=79 // pred_check_branch
          %845 = sbr.rel (%p843) target = $region100
        $region99: #{tpu_custom_call.1} parent=79 // pred_region
          %v846 = vld [vmem:[#allocation2] sm:$0x1]
          %v847 = vmul.f32 %v846, 0.02
          %v848 = vpack.c.bf16 %v847, %v847
          %v849 = vld [vmem:[%s9] sm:$0xf]
          %v850 = vld [vmem:[%s9 + $0x4] sm:$0xf]
          %v851 = vld [vmem:[%s9 + $0x8] sm:$0xf]
          %v852 = vld [vmem:[%s9 + $0xc] sm:$0xf]
          %v853 = vld [vmem:[%s9 + $0x10] sm:$0xf]
          %v854 = vld [vmem:[%s9 + $0x14] sm:$0xf]
          %v855 = vld [vmem:[%s9 + $0x18] sm:$0xf]
          %v856 = vld [vmem:[%s9 + $0x1c] sm:$0xf]
          %v857 = vld [vmem:[%s9 + $0x20] sm:$0xf]
          %v858 = vld [vmem:[%s9 + $0x24] sm:$0xf]
          %v859 = vld [vmem:[%s9 + $0x28] sm:$0xf]
          %v860 = vld [vmem:[%s9 + $0x2c] sm:$0xf]
          %v861 = vld [vmem:[%s9 + $0x30] sm:$0xf]
          %v862 = vld [vmem:[%s9 + $0x34] sm:$0xf]
          %v863 = vld [vmem:[%s9 + $0x38] sm:$0xf]
          %v864 = vld [vmem:[%s9 + $0x3c] sm:$0xf]
          %v865 = vld [vmem:[%s10] sm:$0x1]
          %v882 = vunpack.c.l.b16 %v849
          %v883 = vunpack.c.l.b16 %v850
          %v884 = vunpack.c.l.b16 %v851
          %v885 = vunpack.c.l.b16 %v852
          %v886 = vunpack.c.l.b16 %v853
          %v887 = vunpack.c.l.b16 %v854
          %v888 = vunpack.c.l.b16 %v855
          %v889 = vunpack.c.l.b16 %v856
          %v890 = vunpack.c.l.b16 %v857
          %v891 = vunpack.c.l.b16 %v858
          %v892 = vunpack.c.l.b16 %v859
          %v893 = vunpack.c.l.b16 %v860
          %v894 = vunpack.c.l.b16 %v861
          %v895 = vunpack.c.l.b16 %v862
          %v896 = vunpack.c.l.b16 %v863
          %v897 = vunpack.c.l.b16 %v864
          %v898 = vpack.c.b16 %v883, %v882
          %v899 = vpack.c.b16 %v885, %v884
          %v900 = vpack.c.b16 %v887, %v886
          %v901 = vpack.c.b16 %v889, %v888
          %v902 = vpack.c.b16 %v891, %v890
          %v903 = vpack.c.b16 %v893, %v892
          %v904 = vpack.c.b16 %v895, %v894
          %v905 = vpack.c.b16 %v897, %v896
          %914 = vmatprep.subr.bf16.mxu0 0
          %915 = vmatpush1.bf16.msra.mxu0 %v898
          %916 = vmatprep.subr.bf16.mxu0 0
          %917 = vmatpush1.bf16.msra.mxu0 %v899
          %918 = vmatprep.subr.bf16.mxu0 0
          %919 = vmatpush1.bf16.msra.mxu0 %v900
          %920 = vmatprep.subr.bf16.mxu0 0
          %921 = vmatpush1.bf16.msra.mxu0 %v901
          %922 = vmatprep.subr.bf16.mxu0 0
          %923 = vmatpush1.bf16.msra.mxu0 %v902
          %924 = vmatprep.subr.bf16.mxu0 0
          %925 = vmatpush1.bf16.msra.mxu0 %v903
          %926 = vmatprep.subr.bf16.mxu0 0
          %927 = vmatpush1.bf16.msra.mxu0 %v904
          %928 = vmatprep.subr.bf16.mxu0 0
          %929 = vmatpush1.bf16.msra.mxu0 %v905
          %930 = vmatprep.subr.bf16.mxu0 0
          %931 = vmatpush1.bf16.msra.mxu0 0
          %932 = vmatprep.subr.bf16.mxu0 0
          %933 = vmatpush1.bf16.msra.mxu0 0
          %934 = vmatprep.subr.bf16.mxu0 0
          %935 = vmatpush1.bf16.msra.mxu0 0
          %936 = vmatprep.subr.bf16.mxu0 0
          %937 = vmatpush1.bf16.msra.mxu0 0
          %938 = vmatprep.subr.bf16.mxu0 0
          %939 = vmatpush1.bf16.msra.mxu0 0
          %940 = vmatprep.subr.bf16.mxu0 0
          %941 = vmatpush1.bf16.msra.mxu0 0
          %942 = vmatprep.subr.bf16.mxu0 0
          %943 = vmatpush1.bf16.msra.mxu0 0
          %944 = vmatprep.subr.bf16.mxu0 0
          %945 = vmatpush1.bf16.msra.mxu0 0
          %946 = vmatprep.mubr.bf16.mxu0 0
          %947 = vmatmul.mubr.bf16.gmra.mrb[0].mxu0 %v848
          %v948 = vpop.f32.mrb[0].mxu0
          %v949 = vadd.f32 %v865, %v948
          %v950 = vpop.f32.mrb[0].mxu0
          %v951 = vpop.f32.mrb[0].mxu0
          %v952 = vpop.f32.mrb[0].mxu0
          %953 = vdwg.mxu0
          %v954 = vld [vmem:[%s11] sm:$0x1]
          %v955 = vld [vmem:[%s12] sm:$0x1]
          %vm956 = vcmask 1040384
          %v957 = vsel %vm956, %v949, 0.0
          %958 = vadd.xlane.f32.xlu0 %v957
          %v959 = vpop.xlane.xlu0 %958
          %v960 = vmul.f32 %v959, 0.0078125
          %v961 = vsub.f32 %v949, %v960
          %v962 = vmul.f32 %v961, %v961
          %v963 = vsel %vm956, %v962, 0.0
          %964 = vadd.xlane.f32.xlu0 %v963
          %v965 = vpop.xlane.xlu0 %964
          %v966 = vmul.f32 %v965, 0.0078125
          %v967 = vadd.f32 %v966, 1e-05
          %v968 = vrsqrt.pop %v967
          %v969 = vmul.f32 %v961, %v968
          %v970 = vmul.f32 %v969, %v954
          %v971 = vadd.f32 %v970, %v955
          %v972 = vmax.f32 %v971, 0.0
          %v973 = vpack.c.bf16 %v972, %v972
          %v974 = vld [vmem:[#allocation8] sm:$0xf]
          %v975 = vld [vmem:[#allocation8 + $0x4] sm:$0xf]
          %v976 = vld [vmem:[#allocation8 + $0x8] sm:$0xf]
          %v977 = vld [vmem:[#allocation8 + $0xc] sm:$0xf]
          %v978 = vld [vmem:[#allocation8 + $0x10] sm:$0xf]
          %v979 = vld [vmem:[#allocation8 + $0x14] sm:$0xf]
          %v980 = vld [vmem:[#allocation8 + $0x18] sm:$0xf]
          %v981 = vld [vmem:[#allocation8 + $0x1c] sm:$0xf]
          %v982 = vld [vmem:[#allocation8 + $0x20] sm:$0xf]
          %v983 = vld [vmem:[#allocation8 + $0x24] sm:$0xf]
          %v984 = vld [vmem:[#allocation8 + $0x28] sm:$0xf]
          %v985 = vld [vmem:[#allocation8 + $0x2c] sm:$0xf]
          %v986 = vld [vmem:[#allocation8 + $0x30] sm:$0xf]
          %v987 = vld [vmem:[#allocation8 + $0x34] sm:$0xf]
          %v988 = vld [vmem:[#allocation8 + $0x38] sm:$0xf]
          %v989 = vld [vmem:[#allocation8 + $0x3c] sm:$0xf]
          %v990 = vld [vmem:[%s14] sm:$0x1]
          %v1007 = vunpack.c.l.b16 %v974
          %v1008 = vunpack.c.l.b16 %v975
          %v1009 = vunpack.c.l.b16 %v976
          %v1010 = vunpack.c.l.b16 %v977
          %v1011 = vunpack.c.l.b16 %v978
          %v1012 = vunpack.c.l.b16 %v979
          %v1013 = vunpack.c.l.b16 %v980
          %v1014 = vunpack.c.l.b16 %v981
          %v1015 = vunpack.c.l.b16 %v982
          %v1016 = vunpack.c.l.b16 %v983
          %v1017 = vunpack.c.l.b16 %v984
          %v1018 = vunpack.c.l.b16 %v985
          %v1019 = vunpack.c.l.b16 %v986
          %v1020 = vunpack.c.l.b16 %v987
          %v1021 = vunpack.c.l.b16 %v988
          %v1022 = vunpack.c.l.b16 %v989
          %v1023 = vpack.c.b16 %v1008, %v1007
          %v1024 = vpack.c.b16 %v1010, %v1009
          %v1025 = vpack.c.b16 %v1012, %v1011
          %v1026 = vpack.c.b16 %v1014, %v1013
          %v1027 = vpack.c.b16 %v1016, %v1015
          %v1028 = vpack.c.b16 %v1018, %v1017
          %v1029 = vpack.c.b16 %v1020, %v1019
          %v1030 = vpack.c.b16 %v1022, %v1021
          %1039 = vmatprep.subr.bf16.mxu0 0
          %1040 = vmatpush1.bf16.msra.mxu0 %v1023
          %1041 = vmatprep.subr.bf16.mxu0 0
          %1042 = vmatpush1.bf16.msra.mxu0 %v1024
          %1043 = vmatprep.subr.bf16.mxu0 0
          %1044 = vmatpush1.bf16.msra.mxu0 %v1025
          %1045 = vmatprep.subr.bf16.mxu0 0
          %1046 = vmatpush1.bf16.msra.mxu0 %v1026
          %1047 = vmatprep.subr.bf16.mxu0 0
          %1048 = vmatpush1.bf16.msra.mxu0 %v1027
          %1049 = vmatprep.subr.bf16.mxu0 0
          %1050 = vmatpush1.bf16.msra.mxu0 %v1028
          %1051 = vmatprep.subr.bf16.mxu0 0
          %1052 = vmatpush1.bf16.msra.mxu0 %v1029
          %1053 = vmatprep.subr.bf16.mxu0 0
          %1054 = vmatpush1.bf16.msra.mxu0 %v1030
          %1055 = vmatprep.subr.bf16.mxu0 0
          %1056 = vmatpush1.bf16.msra.mxu0 0
          %1057 = vmatprep.subr.bf16.mxu0 0
          %1058 = vmatpush1.bf16.msra.mxu0 0
          %1059 = vmatprep.subr.bf16.mxu0 0
          %1060 = vmatpush1.bf16.msra.mxu0 0
          %1061 = vmatprep.subr.bf16.mxu0 0
          %1062 = vmatpush1.bf16.msra.mxu0 0
          %1063 = vmatprep.subr.bf16.mxu0 0
          %1064 = vmatpush1.bf16.msra.mxu0 0
          %1065 = vmatprep.subr.bf16.mxu0 0
          %1066 = vmatpush1.bf16.msra.mxu0 0
          %1067 = vmatprep.subr.bf16.mxu0 0
          %1068 = vmatpush1.bf16.msra.mxu0 0
          %1069 = vmatprep.subr.bf16.mxu0 0
          %1070 = vmatpush1.bf16.msra.mxu0 0
          %1071 = vmatprep.mubr.bf16.mxu0 0
          %1072 = vmatmul.mubr.bf16.gmra.mrb[0].mxu0 %v973
          %v1073 = vpop.f32.mrb[0].mxu0
          %v1074 = vadd.f32 %v990, %v1073
          %v1075 = vpop.f32.mrb[0].mxu0
          %v1076 = vpop.f32.mrb[0].mxu0
          %v1077 = vpop.f32.mrb[0].mxu0
          %1078 = vdwg.mxu0
          %1079 = vst [vmem:[#allocation9] sm:$0x1] %v1074
        $region100: #{tpu_custom_call.1} parent=79 // pred_fallthru
          _
        // Predicated region
        $region101: #{tpu_custom_call.1} parent=79 // pred_check
          %p1080 = pneg %p362
        $region102: #{tpu_custom_call.1} parent=79 // pred_check_branch
          %1082 = sbr.rel (%p1080) target = $region104
        $region103: #{tpu_custom_call.1} parent=79 // pred_region
          %s1084 = ssub.s32 16, 16
          %1085 = vsyncadd [#allocation5], %s1084
          %s1087 = sshll.u32 [#allocation9], 4
          %s1088 = int_to_ptr.vmem [resolvable:$true] %s1087
          %1090 = dma.vmem_to_hbm [thread:$0]  %s1088, 16, %s15, [#allocation5]
        $region104: #{tpu_custom_call.1} parent=79 // pred_fallthru
          _
        // Predicated region
        $region105: #{tpu_custom_call.1} parent=79 // pred_check
          %p1091 = pneg %p362
        $region106: #{tpu_custom_call.1} parent=79 // pred_check_branch
          %1093 = sbr.rel (%p1091) target = $region108
        $region107: #{tpu_custom_call.1} parent=79 // pred_region
          %1094 = dma.done [#allocation5], 16
        $region108: #{tpu_custom_call.1} parent=79 // pred_fallthru
          _
      $region80: #{tpu_custom_call.1} parent=5 // pred_fallthru
        _
      %p1095 = scmp.le.s32.totalorder 2, %s24
      // Predicated region
      $region109: #{tpu_custom_call.1} parent=5 // pred_check
        %p1096 = pneg %p1095
      $region110: #{tpu_custom_call.1} parent=5 // pred_check_branch
        %1098 = sbr.rel (%p1096) target = $region112
      $region111: #{tpu_custom_call.1} parent=5 // pred_region
        %s1099 = ssub.s32 %s24, 2
      $region112: #{tpu_custom_call.1} parent=5 // pred_fallthru
        _
    $region6: #{tpu_custom_call.1} parent=1 // loop_footer
      %s28 = sadd.s32 1, %s24
    $region7: #{tpu_custom_call.1} parent=1 // loop_footer_branch
      %23 = sbr.rel target = $region3
    $region8: #{tpu_custom_call.1} parent=1 // loop_exit
      _
    %1100 = vsyncpa [#allocation4], 1
    %s1101 = scalar_lea.sflag [#allocation4], 1
    %1102 = vsyncpa %s1101, 1
    %1103 = vsyncpa [#allocation7], 1
    %1104 = vsyncpa [#allocation5], 1
    %s1105 = scalar_lea.sflag [#allocation5], 1
    %1106 = vsyncpa %s1105, 1

</llo_original>
